<compile_context>
chip_gen: v7x
topology: tpu7x:2x2x1
jax: 0.10.0
libtpu: 0.0.40
codegen_flags: <defaults>
</compile_context>

<pallas_src>
import math
import functools

import jax
import jax.numpy as jnp
from jax.experimental import pallas as pl
from jax.experimental.pallas import tpu as pltpu


# ----------------------------- Pallas kernels ------------------------------

def _ln_matmul_kernel(x_ref, g_ref, b_ref, w_ref, wb_ref, o_ref):
    # o = LayerNorm(x) @ w + wb      (LN fused as prologue)
    x = x_ref[...]
    mean = jnp.mean(x, axis=-1, keepdims=True)
    var = jnp.mean(jnp.square(x - mean), axis=-1, keepdims=True)
    xn = (x - mean) * jax.lax.rsqrt(var + 1e-5) * g_ref[...] + b_ref[...]
    o_ref[...] = (jnp.dot(xn, w_ref[...], preferred_element_type=jnp.float32)
                  + wb_ref[...]).astype(o_ref.dtype)


def ln_matmul(x2d, g, b, w, wb, tm=256):
    M, D = x2d.shape
    N = w.shape[1]
    tm = min(tm, M)
    grid = (pl.cdiv(M, tm),)
    return pl.pallas_call(
        _ln_matmul_kernel,
        grid=grid,
        in_specs=[
            pl.BlockSpec((tm, D), lambda i: (i, 0)),
            pl.BlockSpec((1, D), lambda i: (0, 0)),
            pl.BlockSpec((1, D), lambda i: (0, 0)),
            pl.BlockSpec((D, N), lambda i: (0, 0)),      # resident weight
            pl.BlockSpec((1, N), lambda i: (0, 0)),
        ],
        out_specs=pl.BlockSpec((tm, N), lambda i: (i, 0)),
        out_shape=jax.ShapeDtypeStruct((M, N), jnp.float32),
        compiler_params=pltpu.CompilerParams(dimension_semantics=("parallel",)),
    )(x2d, g.reshape(1, D), b.reshape(1, D), w, wb.reshape(1, N))


def _matmul_kernel(x_ref, w_ref, b_ref, o_ref):
    o_ref[...] = (jnp.dot(x_ref[...], w_ref[...],
                          preferred_element_type=jnp.float32)
                  + b_ref[...]).astype(o_ref.dtype)


def linear(x2d, w, b, tm=256):
    M, D = x2d.shape
    N = w.shape[1]
    tm = min(tm, M)
    grid = (pl.cdiv(M, tm),)
    return pl.pallas_call(
        _matmul_kernel,
        grid=grid,
        in_specs=[
            pl.BlockSpec((tm, D), lambda i: (i, 0)),
            pl.BlockSpec((D, N), lambda i: (0, 0)),
            pl.BlockSpec((1, N), lambda i: (0, 0)),
        ],
        out_specs=pl.BlockSpec((tm, N), lambda i: (i, 0)),
        out_shape=jax.ShapeDtypeStruct((M, N), jnp.float32),
        compiler_params=pltpu.CompilerParams(dimension_semantics=("parallel",)),
    )(x2d, w, b.reshape(1, N))


def _matmul_residual_kernel(x_ref, w_ref, b_ref, r_ref, o_ref):
    # o = residual + x @ w + b        (residual add fused as epilogue)
    o_ref[...] = (r_ref[...]
                  + jnp.dot(x_ref[...], w_ref[...],
                            preferred_element_type=jnp.float32)
                  + b_ref[...]).astype(o_ref.dtype)


def matmul_residual(x2d, w, b, residual2d, tm=256):
    M, D = x2d.shape
    N = w.shape[1]
    tm = min(tm, M)
    grid = (pl.cdiv(M, tm),)
    return pl.pallas_call(
        _matmul_residual_kernel,
        grid=grid,
        in_specs=[
            pl.BlockSpec((tm, D), lambda i: (i, 0)),
            pl.BlockSpec((D, N), lambda i: (0, 0)),
            pl.BlockSpec((1, N), lambda i: (0, 0)),
            pl.BlockSpec((tm, N), lambda i: (i, 0)),
        ],
        out_specs=pl.BlockSpec((tm, N), lambda i: (i, 0)),
        out_shape=jax.ShapeDtypeStruct((M, N), jnp.float32),
        compiler_params=pltpu.CompilerParams(dimension_semantics=("parallel",)),
    )(x2d, w, b.reshape(1, N), residual2d)


def _ln_ffn_residual_kernel(x_ref, g_ref, b_ref, w1_ref, b1_ref, w2_ref, b2_ref, o_ref):
    # o = x + ( relu(LN(x) @ w1 + b1) @ w2 + b2 )
    x = x_ref[...]
    mean = jnp.mean(x, axis=-1, keepdims=True)
    var = jnp.mean(jnp.square(x - mean), axis=-1, keepdims=True)
    xn = (x - mean) * jax.lax.rsqrt(var + 1e-5) * g_ref[...] + b_ref[...]
    h = jnp.dot(xn, w1_ref[...], preferred_element_type=jnp.float32) + b1_ref[...]
    h = jnp.maximum(h, 0.0)
    o_ref[...] = (x
                  + jnp.dot(h, w2_ref[...], preferred_element_type=jnp.float32)
                  + b2_ref[...]).astype(o_ref.dtype)


def ln_ffn_residual(x2d, g, b, w1, b1, w2, b2, tm=256):
    M, D = x2d.shape
    FF = w1.shape[1]
    tm = min(tm, M)
    grid = (pl.cdiv(M, tm),)
    return pl.pallas_call(
        _ln_ffn_residual_kernel,
        grid=grid,
        in_specs=[
            pl.BlockSpec((tm, D), lambda i: (i, 0)),
            pl.BlockSpec((1, D), lambda i: (0, 0)),
            pl.BlockSpec((1, D), lambda i: (0, 0)),
            pl.BlockSpec((D, FF), lambda i: (0, 0)),     # resident weights
            pl.BlockSpec((1, FF), lambda i: (0, 0)),
            pl.BlockSpec((FF, D), lambda i: (0, 0)),
            pl.BlockSpec((1, D), lambda i: (0, 0)),
        ],
        out_specs=pl.BlockSpec((tm, D), lambda i: (i, 0)),
        out_shape=jax.ShapeDtypeStruct((M, D), jnp.float32),
        compiler_params=pltpu.CompilerParams(dimension_semantics=("parallel",)),
    )(x2d, g.reshape(1, D), b.reshape(1, D), w1, b1.reshape(1, FF), w2, b2.reshape(1, D))


def _layernorm_kernel(x_ref, g_ref, b_ref, o_ref):
    x = x_ref[...]
    mean = jnp.mean(x, axis=-1, keepdims=True)
    var = jnp.mean(jnp.square(x - mean), axis=-1, keepdims=True)
    o_ref[...] = ((x - mean) * jax.lax.rsqrt(var + 1e-5)
                  * g_ref[...] + b_ref[...]).astype(o_ref.dtype)


def layer_norm(x2d, g, b, tm=256):
    M, D = x2d.shape
    tm = min(tm, M)
    grid = (pl.cdiv(M, tm),)
    return pl.pallas_call(
        _layernorm_kernel,
        grid=grid,
        in_specs=[
            pl.BlockSpec((tm, D), lambda i: (i, 0)),
            pl.BlockSpec((1, D), lambda i: (0, 0)),
            pl.BlockSpec((1, D), lambda i: (0, 0)),
        ],
        out_specs=pl.BlockSpec((tm, D), lambda i: (i, 0)),
        out_shape=jax.ShapeDtypeStruct((M, D), jnp.float32),
        compiler_params=pltpu.CompilerParams(dimension_semantics=("parallel",)),
    )(x2d, g.reshape(1, D), b.reshape(1, D))


# ------------------------ attention (per (batch, head) grid) ----------------

def _attn_body(q_ref, k_ref, v_ref, m_ref, scale):
    q = q_ref[0]                              # (Tq, Dh)
    k = k_ref[0]                              # (Tk, Dh)
    s = jax.lax.dot_general(q, k, (((1,), (1,)), ((), ())),
                            preferred_element_type=jnp.float32) * scale
    mask = m_ref[0]                           # (Tq, Tk)
    s = jnp.where(mask > 0.5, s, jnp.float32(-1e9))
    s = s - jnp.max(s, axis=-1, keepdims=True)
    e = jnp.exp(s)
    inv = pl.reciprocal(jnp.sum(e, axis=-1, keepdims=True), approx=True)
    return e * inv                            # softmax probabilities (Tq, Tk)


def _attn_kernel(q_ref, k_ref, v_ref, m_ref, o_ref, *, scale):
    p = _attn_body(q_ref, k_ref, v_ref, m_ref, scale)
    o_ref[0] = jnp.dot(p, v_ref[0],
                       preferred_element_type=jnp.float32).astype(o_ref.dtype)


def _attn_kernel_w(q_ref, k_ref, v_ref, m_ref, o_ref, a_ref, *, scale, inv_h):
    p = _attn_body(q_ref, k_ref, v_ref, m_ref, scale)
    h = pl.program_id(1)

    @pl.when(h == 0)
    def _():
        a_ref[...] = jnp.zeros_like(a_ref)

    a_ref[0] = a_ref[0] + p * inv_h           # head-mean accumulated in VMEM
    o_ref[0] = jnp.dot(p, v_ref[0],
                       preferred_element_type=jnp.float32).astype(o_ref.dtype)


def attention(q_arr, kv_arr, mask, *, H, Dh, q_base, k_base, v_base, need_weights):
    """q_arr: [B, Tq, *] fused projection; kv_arr: [B, Tk, *] fused projection.
    Per-head (Dh-wide) column slices are selected through BlockSpec block offsets
    (q_base/k_base/v_base are block indices, i.e. column_offset // Dh).
    mask: [B, Tq, Tk] float (1 = keep).  Returns ([B, Tq, H*Dh], [B, Tq, Tk] | None).
    """
    B, Tq, _ = q_arr.shape
    Tk = kv_arr.shape[1]
    D = H * Dh
    scale = 1.0 / math.sqrt(Dh)

    q_spec = pl.BlockSpec((1, Tq, Dh), lambda b, h: (b, 0, q_base + h))
    k_spec = pl.BlockSpec((1, Tk, Dh), lambda b, h: (b, 0, k_base + h))
    v_spec = pl.BlockSpec((1, Tk, Dh), lambda b, h: (b, 0, v_base + h))
    m_spec = pl.BlockSpec((1, Tq, Tk), lambda b, h: (b, 0, 0))
    o_spec = pl.BlockSpec((1, Tq, Dh), lambda b, h: (b, 0, h))   # lane-dense [B,Tq,D]

    if need_weights:
        out, attn_w = pl.pallas_call(
            functools.partial(_attn_kernel_w, scale=scale, inv_h=1.0 / H),
            grid=(B, H),
            in_specs=[q_spec, k_spec, v_spec, m_spec],
            out_specs=[o_spec,
                       pl.BlockSpec((1, Tq, Tk), lambda b, h: (b, 0, 0))],
            out_shape=[jax.ShapeDtypeStruct((B, Tq, D), jnp.float32),
                       jax.ShapeDtypeStruct((B, Tq, Tk), jnp.float32)],
            compiler_params=pltpu.CompilerParams(
                dimension_semantics=("parallel", "arbitrary")),
        )(q_arr, kv_arr, kv_arr, mask)
        return out, attn_w
    else:
        out = pl.pallas_call(
            functools.partial(_attn_kernel, scale=scale),
            grid=(B, H),
            in_specs=[q_spec, k_spec, v_spec, m_spec],
            out_specs=o_spec,
            out_shape=jax.ShapeDtypeStruct((B, Tq, D), jnp.float32),
            compiler_params=pltpu.CompilerParams(
                dimension_semantics=("parallel", "parallel")),
        )(q_arr, kv_arr, kv_arr, mask)
        return out, None


# ----------------------------- model pieces (glue) -------------------------

def sinusoidal_pe(seq_len, d):
    pos = jnp.arange(seq_len, dtype=jnp.float32)[:, None]
    div = jnp.exp(jnp.arange(0, d, 2, dtype=jnp.float32) * (-math.log(10000.0) / d))
    pe = jnp.zeros((seq_len, d), dtype=jnp.float32)
    pe = pe.at[:, 0::2].set(jnp.sin(pos * div))
    pe = pe.at[:, 1::2].set(jnp.cos(pos * div))
    return pe


def embed(weight, ids, scale_dim):
    # nn.Embedding lookup, scaled by sqrt(embedding_dim)
    return jnp.take(weight, ids, axis=0) * math.sqrt(scale_dim)


def encoder_layer(lp, x2d, self_mask, B, T, H, Dh):
    D = H * Dh
    sa = lp['self_attn']
    qkv = ln_matmul(x2d, lp['ln1_g'], lp['ln1_b'], sa['wqkv'], sa['bqkv'])   # [M, 3D]
    qkv3 = qkv.reshape(B, T, 3 * D)
    ctx, _ = attention(qkv3, qkv3, self_mask, H=H, Dh=Dh,
                       q_base=0, k_base=H, v_base=2 * H, need_weights=False)
    x2d = matmul_residual(ctx.reshape(B * T, D), sa['wo'], sa['bo'], x2d)
    x2d = ln_ffn_residual(x2d, lp['ln2_g'], lp['ln2_b'],
                          lp['ff_w1'], lp['ff_b1'], lp['ff_w2'], lp['ff_b2'])
    return x2d


def encoder_forward(params, embed_src, src_mask, H):
    B, S, D = embed_src.shape
    Dh = D // H
    x = embed_src + sinusoidal_pe(S, D)[None]
    self_mask = jnp.broadcast_to(src_mask.astype(jnp.float32), (B, S, S))
    x2d = x.reshape(B * S, D)
    for lp in params['layers']:
        x2d = encoder_layer(lp, x2d, self_mask, B, S, H, Dh)
    x2d = layer_norm(x2d, params['ln_g'], params['ln_b'])
    return x2d.reshape(B, S, D)


def decoder_layer(lp, x2d, mem2d, self_mask, cross_mask, B, T, S, H, Dh, need_weights):
    D = H * Dh
    # self attention sublayer (pre-LN fused into the QKV projection)
    sa = lp['self_attn']
    qkv = ln_matmul(x2d, lp['ln1_g'], lp['ln1_b'], sa['wqkv'], sa['bqkv'])
    qkv3 = qkv.reshape(B, T, 3 * D)
    ctx, _ = attention(qkv3, qkv3, self_mask, H=H, Dh=Dh,
                       q_base=0, k_base=H, v_base=2 * H, need_weights=False)
    x2d = matmul_residual(ctx.reshape(B * T, D), sa['wo'], sa['bo'], x2d)

    # cross attention sublayer (LN on decoder side only; memory used as-is)
    ca = lp['cross_attn']
    qn = ln_matmul(x2d, lp['ln2_g'], lp['ln2_b'], ca['wq'], ca['bq'])        # [M, D]
    kv = linear(mem2d, ca['wkv'], ca['bkv'])                                 # [B*S, 2D]
    ctx, cross_w = attention(qn.reshape(B, T, D), kv.reshape(B, S, 2 * D),
                             cross_mask, H=H, Dh=Dh,
                             q_base=0, k_base=0, v_base=H,
                             need_weights=need_weights)
    x2d = matmul_residual(ctx.reshape(B * T, D), ca['wo'], ca['bo'], x2d)

    # feed-forward sublayer
    x2d = ln_ffn_residual(x2d, lp['ln3_g'], lp['ln3_b'],
                          lp['ff_w1'], lp['ff_b1'], lp['ff_w2'], lp['ff_b2'])
    return x2d, cross_w


def context_representation(lp, x2d, mem2d, self_mask, cross_mask, B, T, S, H, Dh):
    # TODO(synk): exact semantics of TransformerDecoderLayer.context_representation
    # are not shown; implemented as last layer's self-attn + cross-attn sublayers
    # (pre-LN, residual) on the penultimate state, without the feed-forward sublayer.
    D = H * Dh
    sa = lp['self_attn']
    qkv = ln_matmul(x2d, lp['ln1_g'], lp['ln1_b'], sa['wqkv'], sa['bqkv'])
    qkv3 = qkv.reshape(B, T, 3 * D)
    ctx, _ = attention(qkv3, qkv3, self_mask, H=H, Dh=Dh,
                       q_base=0, k_base=H, v_base=2 * H, need_weights=False)
    x2d = matmul_residual(ctx.reshape(B * T, D), sa['wo'], sa['bo'], x2d)

    ca = lp['cross_attn']
    qn = ln_matmul(x2d, lp['ln2_g'], lp['ln2_b'], ca['wq'], ca['bq'])
    kv = linear(mem2d, ca['wkv'], ca['bkv'])
    ctx, _ = attention(qn.reshape(B, T, D), kv.reshape(B, S, 2 * D),
                       cross_mask, H=H, Dh=Dh,
                       q_base=0, k_base=0, v_base=H, need_weights=False)
    x2d = matmul_residual(ctx.reshape(B * T, D), ca['wo'], ca['bo'], x2d)
    return x2d


def decoder_forward(params, embed_trg, encoder_output, src_mask, trg_mask, H):
    B, T, D = embed_trg.shape
    S = encoder_output.shape[1]
    Dh = D // H
    x = embed_trg + sinusoidal_pe(T, D)[None]
    causal = jnp.tril(jnp.ones((T, T), dtype=jnp.float32))        # subsequent_mask
    self_mask = trg_mask.astype(jnp.float32) * causal[None]       # [B, T, T]
    cross_mask = jnp.broadcast_to(src_mask.astype(jnp.float32), (B, T, S))
    mem2d = encoder_output.reshape(B * S, D)

    x2d = x.reshape(B * T, D)
    pen2d = x2d
    cross_w = None
    n_layers = len(params['layers'])
    for li, lp in enumerate(params['layers']):
        pen2d = x2d
        # only the last layer's cross-attention weights are ever consumed
        x2d, cw = decoder_layer(lp, x2d, mem2d, self_mask, cross_mask,
                                B, T, S, H, Dh, need_weights=(li == n_layers - 1))
        if cw is not None:
            cross_w = cw
    pen_repr2d = context_representation(params['layers'][-1], pen2d, mem2d,
                                        self_mask, cross_mask, B, T, S, H, Dh)
    out2d = layer_norm(x2d, params['ln_g'], params['ln_b'])
    return out2d.reshape(B, T, D), pen_repr2d.reshape(B, T, D), cross_w


def transformer_encode_decode(params, src_input, trg_input, src_mask, trg_mask, H):
    D = params['src_emb'].shape[1]
    embed_src = embed(params['src_emb'], src_input, D)
    encode_output = encoder_forward(params['encoder'], embed_src, src_mask, H)
    embed_trg = embed(params['trg_emb'], trg_input, D)
    decode_output, pen_repr, cross_w = decoder_forward(
        params['decoder'], embed_trg, encode_output, src_mask, trg_mask, H)
    return decode_output, pen_repr, cross_w, encode_output


# ----------------------------- parameter init ------------------------------

def _init_self_attn(key, D):
    ks = jax.random.split(key, 2)
    return {
        'wqkv': jax.random.normal(ks[0], (D, 3 * D), jnp.float32) * 0.02,
        'bqkv': jnp.zeros((3 * D,), jnp.float32),
        'wo': jax.random.normal(ks[1], (D, D), jnp.float32) * 0.02,
        'bo': jnp.zeros((D,), jnp.float32),
    }


def _init_cross_attn(key, D):
    ks = jax.random.split(key, 3)
    return {
        'wq': jax.random.normal(ks[0], (D, D), jnp.float32) * 0.02,
        'bq': jnp.zeros((D,), jnp.float32),
        'wkv': jax.random.normal(ks[1], (D, 2 * D), jnp.float32) * 0.02,
        'bkv': jnp.zeros((2 * D,), jnp.float32),
        'wo': jax.random.normal(ks[2], (D, D), jnp.float32) * 0.02,
        'bo': jnp.zeros((D,), jnp.float32),
    }


def _init_enc_layer(key, D, FF):
    ks = jax.random.split(key, 3)
    return {
        'self_attn': _init_self_attn(ks[0], D),
        'ln1_g': jnp.ones((D,), jnp.float32), 'ln1_b': jnp.zeros((D,), jnp.float32),
        'ln2_g': jnp.ones((D,), jnp.float32), 'ln2_b': jnp.zeros((D,), jnp.float32),
        'ff_w1': jax.random.normal(ks[1], (D, FF), jnp.float32) * 0.02,
        'ff_b1': jnp.zeros((FF,), jnp.float32),
        'ff_w2': jax.random.normal(ks[2], (FF, D), jnp.float32) * 0.02,
        'ff_b2': jnp.zeros((D,), jnp.float32),
    }


def _init_dec_layer(key, D, FF):
    ks = jax.random.split(key, 4)
    return {
        'self_attn': _init_self_attn(ks[0], D),
        'cross_attn': _init_cross_attn(ks[1], D),
        'ln1_g': jnp.ones((D,), jnp.float32), 'ln1_b': jnp.zeros((D,), jnp.float32),
        'ln2_g': jnp.ones((D,), jnp.float32), 'ln2_b': jnp.zeros((D,), jnp.float32),
        'ln3_g': jnp.ones((D,), jnp.float32), 'ln3_b': jnp.zeros((D,), jnp.float32),
        'ff_w1': jax.random.normal(ks[2], (D, FF), jnp.float32) * 0.02,
        'ff_b1': jnp.zeros((FF,), jnp.float32),
        'ff_w2': jax.random.normal(ks[3], (FF, D), jnp.float32) * 0.02,
        'ff_b2': jnp.zeros((D,), jnp.float32),
    }


def init_params(key, vocab_size, D, FF, n_layers, pad_index=1):
    ks = jax.random.split(key, 2 * n_layers + 2)
    src_emb = jax.random.normal(ks[0], (vocab_size, D), jnp.float32) * 0.02
    trg_emb = jax.random.normal(ks[1], (vocab_size, D), jnp.float32) * 0.02
    src_emb = src_emb.at[pad_index].set(0.0)      # padding_idx row is zero
    trg_emb = trg_emb.at[pad_index].set(0.0)
    enc_layers = [_init_enc_layer(ks[2 + i], D, FF) for i in range(n_layers)]
    dec_layers = [_init_dec_layer(ks[2 + n_layers + i], D, FF) for i in range(n_layers)]
    return {
        'src_emb': src_emb,
        'trg_emb': trg_emb,
        'encoder': {'layers': enc_layers,
                    'ln_g': jnp.ones((D,), jnp.float32),
                    'ln_b': jnp.zeros((D,), jnp.float32)},
        'decoder': {'layers': dec_layers,
                    'ln_g': jnp.ones((D,), jnp.float32),
                    'ln_b': jnp.zeros((D,), jnp.float32)},
    }


# ----------------------------- main -----------------------------------------

if __name__ == "__main__":
    # (8,128)-aligned toy config: D multiple of 128, Dh = D/H = 128, FF multiple of 128.
    B, SRC_LEN, TRG_LEN = 2, 8, 8
    D, FF, H, N_LAYERS = 256, 512, 2, 2
    VOCAB = 64

    key = jax.random.PRNGKey(0)
    k_param, k_src, k_trg = jax.random.split(key, 3)
    params = init_params(k_param, VOCAB, D, FF, N_LAYERS)

    src_input = jax.random.randint(k_src, (B, SRC_LEN), 2, VOCAB, dtype=jnp.int32)
    trg_input = jax.random.randint(k_trg, (B, TRG_LEN), 2, VOCAB, dtype=jnp.int32)
    src_mask = jnp.ones((B, 1, SRC_LEN), dtype=jnp.float32)   # 1 = valid token
    trg_mask = jnp.ones((B, 1, TRG_LEN), dtype=jnp.float32)

    dec_out, pen_repr, cross_w, enc_out = transformer_encode_decode(
        params, src_input, trg_input, src_mask, trg_mask, H)

    jax.block_until_ready((dec_out, pen_repr, cross_w, enc_out))
    assert dec_out.shape == (B, TRG_LEN, D)
    assert pen_repr.shape == (B, TRG_LEN, D)
    assert cross_w.shape == (B, TRG_LEN, SRC_LEN)
    assert enc_out.shape == (B, SRC_LEN, D)
    print("KERNEL_OK")
</pallas_src>

<mosaic_0001>
module attributes {stable_mosaic.version = 11 : i64} {
  func.func @_ln_matmul_kernel(%arg0: i32, %arg1: memref<16x256xf32, #tpu.memory_space<vmem>>, %arg2: memref<1x256xf32, #tpu.memory_space<vmem>>, %arg3: memref<1x256xf32, #tpu.memory_space<vmem>>, %arg4: memref<256x768xf32, #tpu.memory_space<vmem>>, %arg5: memref<1x768xf32, #tpu.memory_space<vmem>>, %arg6: memref<16x768xf32, #tpu.memory_space<vmem>>) attributes {dimension_semantics = [#tpu.dimension_semantics<parallel>], iteration_bounds = array<i64: 1>, scalar_prefetch = 0 : i64, scratch_operands = 0 : i64, tpu.core_type = #tpu.core_type<tc>, window_params = [{transform_indices = @transform_0, window_bounds = array<i64: 16, 256>}, {pipeline_mode = #tpu.pipeline_mode<synchronous>, transform_indices = @transform_1, window_bounds = array<i64: 1, 256>}, {pipeline_mode = #tpu.pipeline_mode<synchronous>, transform_indices = @transform_2, window_bounds = array<i64: 1, 256>}, {pipeline_mode = #tpu.pipeline_mode<synchronous>, transform_indices = @transform_3, window_bounds = array<i64: 256, 768>}, {pipeline_mode = #tpu.pipeline_mode<synchronous>, transform_indices = @transform_4, window_bounds = array<i64: 1, 768>}, {transform_indices = @transform_5, window_bounds = array<i64: 16, 768>}]} {
    %c0 = arith.constant 0 : index
    %c0_0 = arith.constant 0 : index
    %0 = vector.load %arg1[%c0, %c0_0] : memref<16x256xf32, #tpu.memory_space<vmem>>, vector<16x256xf32>
    %cst = arith.constant dense<0.000000e+00> : vector<16xf32>
    %1 = vector.multi_reduction <add>, %0, %cst [1] : vector<16x256xf32> to vector<16xf32>
    %2 = vector.shape_cast %1 : vector<16xf32> to vector<16x1xf32>
    %cst_1 = arith.constant 2.560000e+02 : f32
    %3 = vector.broadcast %cst_1 : f32 to vector<16x1xf32>
    %4 = arith.divf %2, %3 : vector<16x1xf32>
    %5 = vector.broadcast %4 : vector<16x1xf32> to vector<16x256xf32>
    %6 = arith.subf %0, %5 : vector<16x256xf32>
    %7 = arith.mulf %6, %6 : vector<16x256xf32>
    %cst_2 = arith.constant dense<0.000000e+00> : vector<16xf32>
    %8 = vector.multi_reduction <add>, %7, %cst_2 [1] : vector<16x256xf32> to vector<16xf32>
    %9 = vector.shape_cast %8 : vector<16xf32> to vector<16x1xf32>
    %cst_3 = arith.constant 2.560000e+02 : f32
    %10 = vector.broadcast %cst_3 : f32 to vector<16x1xf32>
    %11 = arith.divf %9, %10 : vector<16x1xf32>
    %12 = vector.broadcast %4 : vector<16x1xf32> to vector<16x256xf32>
    %13 = arith.subf %0, %12 : vector<16x256xf32>
    %cst_4 = arith.constant 9.99999974E-6 : f32
    %14 = vector.broadcast %cst_4 : f32 to vector<16x1xf32>
    %15 = arith.addf %11, %14 : vector<16x1xf32>
    %16 = math.rsqrt %15 : vector<16x1xf32>
    %17 = vector.broadcast %16 : vector<16x1xf32> to vector<16x256xf32>
    %18 = arith.mulf %13, %17 : vector<16x256xf32>
    %c0_5 = arith.constant 0 : index
    %c0_6 = arith.constant 0 : index
    %19 = vector.load %arg2[%c0_5, %c0_6] : memref<1x256xf32, #tpu.memory_space<vmem>>, vector<1x256xf32>
    %20 = vector.broadcast %19 : vector<1x256xf32> to vector<16x256xf32>
    %21 = arith.mulf %18, %20 : vector<16x256xf32>
    %c0_7 = arith.constant 0 : index
    %c0_8 = arith.constant 0 : index
    %22 = vector.load %arg3[%c0_7, %c0_8] : memref<1x256xf32, #tpu.memory_space<vmem>>, vector<1x256xf32>
    %23 = vector.broadcast %22 : vector<1x256xf32> to vector<16x256xf32>
    %24 = arith.addf %21, %23 : vector<16x256xf32>
    %c0_9 = arith.constant 0 : index
    %c0_10 = arith.constant 0 : index
    %25 = vector.load %arg4[%c0_9, %c0_10] : memref<256x768xf32, #tpu.memory_space<vmem>>, vector<256x768xf32>
    %cst_11 = arith.constant dense<0.000000e+00> : vector<16x768xf32>
    %26 = tpu.matmul %24, %25, %cst_11 {dimension_numbers = #tpu.dot_dimension_numbers<[1], [0], [0], [1], [0, 0, 1, 1], [], []>} : vector<16x256xf32>, vector<256x768xf32>, vector<16x768xf32> -> vector<16x768xf32>
    %c0_12 = arith.constant 0 : index
    %c0_13 = arith.constant 0 : index
    %27 = vector.load %arg5[%c0_12, %c0_13] : memref<1x768xf32, #tpu.memory_space<vmem>>, vector<1x768xf32>
    %28 = vector.broadcast %27 : vector<1x768xf32> to vector<16x768xf32>
    %29 = arith.addf %26, %28 : vector<16x768xf32>
    %c0_14 = arith.constant 0 : index
    %c0_15 = arith.constant 0 : index
    %30 = vector.load %arg6[%c0_14, %c0_15] : memref<16x768xf32, #tpu.memory_space<vmem>>, vector<16x768xf32>
    tpu.vector_store %arg6[%c0_14, %c0_15], %29 {strides = array<i32>} : memref<16x768xf32, #tpu.memory_space<vmem>>, vector<16x768xf32>,
    return
  }
  func.func @transform_0(%arg0: i32) -> (i32, i32) {
    %c0_i32 = arith.constant 0 : i32
    %c0_i32_0 = arith.constant 0 : i32
    return %arg0, %c0_i32 : i32, i32
  }
  func.func @transform_1(%arg0: i32) -> (i32, i32) {
    %c0_i32 = arith.constant 0 : i32
    %c0_i32_0 = arith.constant 0 : i32
    %c0_i32_1 = arith.constant 0 : i32
    return %c0_i32, %c0_i32_0 : i32, i32
  }
  func.func @transform_2(%arg0: i32) -> (i32, i32) {
    %c0_i32 = arith.constant 0 : i32
    %c0_i32_0 = arith.constant 0 : i32
    %c0_i32_1 = arith.constant 0 : i32
    return %c0_i32, %c0_i32_0 : i32, i32
  }
  func.func @transform_3(%arg0: i32) -> (i32, i32) {
    %c0_i32 = arith.constant 0 : i32
    %c0_i32_0 = arith.constant 0 : i32
    %c0_i32_1 = arith.constant 0 : i32
    return %c0_i32, %c0_i32_0 : i32, i32
  }
  func.func @transform_4(%arg0: i32) -> (i32, i32) {
    %c0_i32 = arith.constant 0 : i32
    %c0_i32_0 = arith.constant 0 : i32
    %c0_i32_1 = arith.constant 0 : i32
    return %c0_i32, %c0_i32_0 : i32, i32
  }
  func.func @transform_5(%arg0: i32) -> (i32, i32) {
    %c0_i32 = arith.constant 0 : i32
    %c0_i32_0 = arith.constant 0 : i32
    return %arg0, %c0_i32 : i32, i32
  }
}

</mosaic_0001>

<llo_original>
// kernel: tpu_custom_call.1
$region0: #{tpu_custom_call.1}
  #allocation0 [shape = 'u32[]', space=smem, size = 0x4, offset = 0x4, fixed_abs, tag = 'smem constant byte address 0x4 - core index']
  #allocation1 [shape = 'u32[144,128]{1,0:T(1,128)}', space=vmem, size = 0x12000, scoped, tag = 'internal scratch']
  %s0 = inlined_call_operand.hbm [shape: f32[16,256], index: 0, kind: input, shape index: {}]
  %s1 = inlined_call_operand.vmem [shape: f32[1,256], index: 1, kind: input, shape index: {}]
  %s2 = inlined_call_operand.vmem [shape: f32[1,256], index: 2, kind: input, shape index: {}]
  %s3 = inlined_call_operand.hbm [shape: f32[256,768], index: 3, kind: input, shape index: {}]
  %s4 = inlined_call_operand.vmem [shape: f32[1,768], index: 4, kind: input, shape index: {}]
  %s5 = inlined_call_operand.hbm [shape: f32[16,768], index: 5, kind: output, shape index: {}]
  %s6 = sld [smem:[#allocation0]]
  $region38: #{tpu_custom_call.1} parent=0
    _
  %s8 = ssub.s32 1, %s6
  %s9 = scalar_select 0, %s8, %s6
  $region1: #{tpu_custom_call.1} parent=0
    #allocation2 [shape = 'u8[16384]{0}', space=vmem, size = 0x4000, scoped, tag = 'input window, operand 0, single buffered']
    #allocation3 [shape = 's32[1]{0}', space=sflag, size = 0x4, scoped, tag = 'scoped memory for tpu_custom_call.1']
    #allocation4 [shape = 's32[1]{0}', space=sflag, size = 0x4, scoped, tag = 'scoped memory for tpu_custom_call.1']
    #allocation5 [shape = 'u8[786432]{0}', space=vmem, size = 0xc0000, scoped, tag = 'input window, operand 3, single buffered']
    #allocation6 [shape = 's32[1]{0}', space=sflag, size = 0x4, scoped, tag = 'scoped memory for tpu_custom_call.1']
    #allocation7 [shape = 'u8[49152]{0}', space=vmem, size = 0xc000, scoped, tag = 'output window, operand 0, single buffered']
    %10 = vsyncpa [#allocation3], 0
    %11 = vsyncpa [#allocation6], 0
    %12 = vsyncpa [#allocation4], 0
    // Predicated region
    $region2: #{tpu_custom_call.1} parent=1 // pred_check
      _
    $region3: #{tpu_custom_call.1} parent=1 // pred_check_branch
      %14 = sbr.rel (0) target = $region5
    $region4: #{tpu_custom_call.1} parent=1 // pred_region
      %s16 = ssub.s32 512, 512
      %17 = vsyncadd [#allocation3], %s16
      %s18 = sshll.u32 [#allocation2], 4
      %s19 = int_to_ptr.vmem [resolvable:$true] %s18
      %24 = dma.hbm_to_vmem [thread:$0]  %s0, 512, %s19, [#allocation3], 256, 256, 16
    $region5: #{tpu_custom_call.1} parent=1 // pred_fallthru
      _
    // Predicated region
    $region6: #{tpu_custom_call.1} parent=1 // pred_check
      _
    $region7: #{tpu_custom_call.1} parent=1 // pred_check_branch
      %26 = sbr.rel (0) target = $region9
    $region8: #{tpu_custom_call.1} parent=1 // pred_region
      _
    $region9: #{tpu_custom_call.1} parent=1 // pred_fallthru
      _
    // Predicated region
    $region10: #{tpu_custom_call.1} parent=1 // pred_check
      _
    $region11: #{tpu_custom_call.1} parent=1 // pred_check_branch
      %28 = sbr.rel (0) target = $region13
    $region12: #{tpu_custom_call.1} parent=1 // pred_region
      _
    $region13: #{tpu_custom_call.1} parent=1 // pred_fallthru
      _
    // Predicated region
    $region14: #{tpu_custom_call.1} parent=1 // pred_check
      _
    $region15: #{tpu_custom_call.1} parent=1 // pred_check_branch
      %30 = sbr.rel (0) target = $region17
    $region16: #{tpu_custom_call.1} parent=1 // pred_region
      %s32 = ssub.s32 24576, 24576
      %33 = vsyncadd [#allocation6], %s32
      %s34 = sshll.u32 [#allocation5], 4
      %s35 = int_to_ptr.vmem [resolvable:$true] %s34
      %40 = dma.hbm_to_vmem [thread:$0]  %s3, 24576, %s35, [#allocation6], 768, 768, 48
    $region17: #{tpu_custom_call.1} parent=1 // pred_fallthru
      _
    // Predicated region
    $region18: #{tpu_custom_call.1} parent=1 // pred_check
      _
    $region19: #{tpu_custom_call.1} parent=1 // pred_check_branch
      %42 = sbr.rel (0) target = $region21
    $region20: #{tpu_custom_call.1} parent=1 // pred_region
      _
    $region21: #{tpu_custom_call.1} parent=1 // pred_fallthru
      _
    // Predicated region
    $region22: #{tpu_custom_call.1} parent=1 // pred_check
      _
    $region23: #{tpu_custom_call.1} parent=1 // pred_check_branch
      %44 = sbr.rel (0) target = $region25
    $region24: #{tpu_custom_call.1} parent=1 // pred_region
      %45 = dma.done [#allocation3], 512
    $region25: #{tpu_custom_call.1} parent=1 // pred_fallthru
      _
    // Predicated region
    $region26: #{tpu_custom_call.1} parent=1 // pred_check
      _
    $region27: #{tpu_custom_call.1} parent=1 // pred_check_branch
      %47 = sbr.rel (0) target = $region29
    $region28: #{tpu_custom_call.1} parent=1 // pred_region
      %48 = dma.done [#allocation6], 24576
    $region29: #{tpu_custom_call.1} parent=1 // pred_fallthru
      _
    %v49 = vld [vmem:[#allocation2] sm:$0xff]
    %v50 = vld [vmem:[#allocation2 + $0x8] sm:$0xff]
    %v51 = vld [vmem:[#allocation2 + $0x10] sm:$0xff]
    %v52 = vld [vmem:[#allocation2 + $0x18] sm:$0xff]
    %v53 = vadd.f32 %v49, %v50
    %54 = vadd.xlane.f32.xlu0 %v53
    %v55 = vpop.xlane.xlu0 %54
    %v56 = vadd.f32 %v51, %v52
    %57 = vadd.xlane.f32.xlu0 %v56
    %v58 = vpop.xlane.xlu0 %57
    %v59 = vrcp.pop 256.0
    %v60 = vmul.f32 %v55, %v59
    %v61 = vmul.f32 %v58, %v59
    %v62 = vsub.f32 %v49, %v60
    %v63 = vsub.f32 %v50, %v60
    %v64 = vsub.f32 %v51, %v61
    %v65 = vsub.f32 %v52, %v61
    %v66 = vmul.f32 %v62, %v62
    %v67 = vmul.f32 %v63, %v63
    %v68 = vmul.f32 %v64, %v64
    %v69 = vmul.f32 %v65, %v65
    %v70 = vadd.f32 %v66, %v67
    %71 = vadd.xlane.f32.xlu0 %v70
    %v72 = vpop.xlane.xlu0 %71
    %v73 = vadd.f32 %v68, %v69
    %74 = vadd.xlane.f32.xlu0 %v73
    %v75 = vpop.xlane.xlu0 %74
    %v76 = vmul.f32 %v72, %v59
    %v77 = vmul.f32 %v75, %v59
    %v78 = vadd.f32 %v76, 1e-05
    %v79 = vadd.f32 %v77, 1e-05
    %v80 = vrsqrt.pop %v78
    %v81 = vrsqrt.pop %v79
    %v82 = vmul.f32 %v62, %v80
    %v83 = vmul.f32 %v63, %v80
    %v84 = vmul.f32 %v64, %v81
    %v85 = vmul.f32 %v65, %v81
    %v86 = vld [vmem:[%s1] sm:$0x3]
    %v88 = vlaneseq
    %v89 = vshrl.u32 %v88, 7
    %v90 = vsub.s32 0, %v89
    %v91 = vrot.slane %v86, %v90
    %v92 = vlaneseq
    %v93 = vshrl.u32 %v92, 7
    %v94 = vsub.s32 1, %v93
    %v95 = vrot.slane %v86, %v94
    %v98 = vmul.f32 %v82, %v91
    %v99 = vmul.f32 %v83, %v95
    %v100 = vmul.f32 %v84, %v91
    %v101 = vmul.f32 %v85, %v95
    %v102 = vld [vmem:[%s2] sm:$0x3]
    %v104 = vlaneseq
    %v105 = vshrl.u32 %v104, 7
    %v106 = vsub.s32 0, %v105
    %v107 = vrot.slane %v102, %v106
    %v108 = vlaneseq
    %v109 = vshrl.u32 %v108, 7
    %v110 = vsub.s32 1, %v109
    %v111 = vrot.slane %v102, %v110
    %v114 = vadd.f32 %v98, %v107
    %v115 = vadd.f32 %v99, %v111
    %v116 = vadd.f32 %v100, %v107
    %v117 = vadd.f32 %v101, %v111
    %v118 = vld [vmem:[#allocation5] sm:$0xff]
    %v119 = vld [vmem:[#allocation5 + $0x8] sm:$0xff]
    %v120 = vld [vmem:[#allocation5 + $0x10] sm:$0xff]
    %v121 = vld [vmem:[#allocation5 + $0x18] sm:$0xff]
    %v122 = vld [vmem:[#allocation5 + $0x20] sm:$0xff]
    %v123 = vld [vmem:[#allocation5 + $0x28] sm:$0xff]
    %v124 = vld [vmem:[#allocation5 + $0x30] sm:$0xff]
    %v125 = vld [vmem:[#allocation5 + $0x38] sm:$0xff]
    %v126 = vld [vmem:[#allocation5 + $0x40] sm:$0xff]
    %v127 = vld [vmem:[#allocation5 + $0x48] sm:$0xff]
    %v128 = vld [vmem:[#allocation5 + $0x50] sm:$0xff]
    %v129 = vld [vmem:[#allocation5 + $0x58] sm:$0xff]
    %v130 = vld [vmem:[#allocation5 + $0x60] sm:$0xff]
    %v131 = vld [vmem:[#allocation5 + $0x68] sm:$0xff]
    %v132 = vld [vmem:[#allocation5 + $0x70] sm:$0xff]
    %v133 = vld [vmem:[#allocation5 + $0x78] sm:$0xff]
    %v134 = vld [vmem:[#allocation5 + $0x80] sm:$0xff]
    %v135 = vld [vmem:[#allocation5 + $0x88] sm:$0xff]
    %v136 = vld [vmem:[#allocation5 + $0x90] sm:$0xff]
    %v137 = vld [vmem:[#allocation5 + $0x98] sm:$0xff]
    %v138 = vld [vmem:[#allocation5 + $0xa0] sm:$0xff]
    %v139 = vld [vmem:[#allocation5 + $0xa8] sm:$0xff]
    %v140 = vld [vmem:[#allocation5 + $0xb0] sm:$0xff]
    %v141 = vld [vmem:[#allocation5 + $0xb8] sm:$0xff]
    %v142 = vld [vmem:[#allocation5 + $0xc0] sm:$0xff]
    %v143 = vld [vmem:[#allocation5 + $0xc8] sm:$0xff]
    %v144 = vld [vmem:[#allocation5 + $0xd0] sm:$0xff]
    %v145 = vld [vmem:[#allocation5 + $0xd8] sm:$0xff]
    %v146 = vld [vmem:[#allocation5 + $0xe0] sm:$0xff]
    %v147 = vld [vmem:[#allocation5 + $0xe8] sm:$0xff]
    %v148 = vld [vmem:[#allocation5 + $0xf0] sm:$0xff]
    %v149 = vld [vmem:[#allocation5 + $0xf8] sm:$0xff]
    %v150 = vld [vmem:[#allocation5 + $0x100] sm:$0xff]
    %v151 = vld [vmem:[#allocation5 + $0x108] sm:$0xff]
    %v152 = vld [vmem:[#allocation5 + $0x110] sm:$0xff]
    %v153 = vld [vmem:[#allocation5 + $0x118] sm:$0xff]
    %v154 = vld [vmem:[#allocation5 + $0x120] sm:$0xff]
    %v155 = vld [vmem:[#allocation5 + $0x128] sm:$0xff]
    %v156 = vld [vmem:[#allocation5 + $0x130] sm:$0xff]
    %v157 = vld [vmem:[#allocation5 + $0x138] sm:$0xff]
    %v158 = vld [vmem:[#allocation5 + $0x140] sm:$0xff]
    %v159 = vld [vmem:[#allocation5 + $0x148] sm:$0xff]
    %v160 = vld [vmem:[#allocation5 + $0x150] sm:$0xff]
    %v161 = vld [vmem:[#allocation5 + $0x158] sm:$0xff]
    %v162 = vld [vmem:[#allocation5 + $0x160] sm:$0xff]
    %v163 = vld [vmem:[#allocation5 + $0x168] sm:$0xff]
    %v164 = vld [vmem:[#allocation5 + $0x170] sm:$0xff]
    %v165 = vld [vmem:[#allocation5 + $0x178] sm:$0xff]
    %v166 = vld [vmem:[#allocation5 + $0x180] sm:$0xff]
    %v167 = vld [vmem:[#allocation5 + $0x188] sm:$0xff]
    %v168 = vld [vmem:[#allocation5 + $0x190] sm:$0xff]
    %v169 = vld [vmem:[#allocation5 + $0x198] sm:$0xff]
    %v170 = vld [vmem:[#allocation5 + $0x1a0] sm:$0xff]
    %v171 = vld [vmem:[#allocation5 + $0x1a8] sm:$0xff]
    %v172 = vld [vmem:[#allocation5 + $0x1b0] sm:$0xff]
    %v173 = vld [vmem:[#allocation5 + $0x1b8] sm:$0xff]
    %v174 = vld [vmem:[#allocation5 + $0x1c0] sm:$0xff]
    %v175 = vld [vmem:[#allocation5 + $0x1c8] sm:$0xff]
    %v176 = vld [vmem:[#allocation5 + $0x1d0] sm:$0xff]
    %v177 = vld [vmem:[#allocation5 + $0x1d8] sm:$0xff]
    %v178 = vld [vmem:[#allocation5 + $0x1e0] sm:$0xff]
    %v179 = vld [vmem:[#allocation5 + $0x1e8] sm:$0xff]
    %v180 = vld [vmem:[#allocation5 + $0x1f0] sm:$0xff]
    %v181 = vld [vmem:[#allocation5 + $0x1f8] sm:$0xff]
    %v182 = vld [vmem:[#allocation5 + $0x200] sm:$0xff]
    %v183 = vld [vmem:[#allocation5 + $0x208] sm:$0xff]
    %v184 = vld [vmem:[#allocation5 + $0x210] sm:$0xff]
    %v185 = vld [vmem:[#allocation5 + $0x218] sm:$0xff]
    %v186 = vld [vmem:[#allocation5 + $0x220] sm:$0xff]
    %v187 = vld [vmem:[#allocation5 + $0x228] sm:$0xff]
    %v188 = vld [vmem:[#allocation5 + $0x230] sm:$0xff]
    %v189 = vld [vmem:[#allocation5 + $0x238] sm:$0xff]
    %v190 = vld [vmem:[#allocation5 + $0x240] sm:$0xff]
    %v191 = vld [vmem:[#allocation5 + $0x248] sm:$0xff]
    %v192 = vld [vmem:[#allocation5 + $0x250] sm:$0xff]
    %v193 = vld [vmem:[#allocation5 + $0x258] sm:$0xff]
    %v194 = vld [vmem:[#allocation5 + $0x260] sm:$0xff]
    %v195 = vld [vmem:[#allocation5 + $0x268] sm:$0xff]
    %v196 = vld [vmem:[#allocation5 + $0x270] sm:$0xff]
    %v197 = vld [vmem:[#allocation5 + $0x278] sm:$0xff]
    %v198 = vld [vmem:[#allocation5 + $0x280] sm:$0xff]
    %v199 = vld [vmem:[#allocation5 + $0x288] sm:$0xff]
    %v200 = vld [vmem:[#allocation5 + $0x290] sm:$0xff]
    %v201 = vld [vmem:[#allocation5 + $0x298] sm:$0xff]
    %v202 = vld [vmem:[#allocation5 + $0x2a0] sm:$0xff]
    %v203 = vld [vmem:[#allocation5 + $0x2a8] sm:$0xff]
    %v204 = vld [vmem:[#allocation5 + $0x2b0] sm:$0xff]
    %v205 = vld [vmem:[#allocation5 + $0x2b8] sm:$0xff]
    %v206 = vld [vmem:[#allocation5 + $0x2c0] sm:$0xff]
    %v207 = vld [vmem:[#allocation5 + $0x2c8] sm:$0xff]
    %v208 = vld [vmem:[#allocation5 + $0x2d0] sm:$0xff]
    %v209 = vld [vmem:[#allocation5 + $0x2d8] sm:$0xff]
    %v210 = vld [vmem:[#allocation5 + $0x2e0] sm:$0xff]
    %v211 = vld [vmem:[#allocation5 + $0x2e8] sm:$0xff]
    %v212 = vld [vmem:[#allocation5 + $0x2f0] sm:$0xff]
    %v213 = vld [vmem:[#allocation5 + $0x2f8] sm:$0xff]
    %v214 = vld [vmem:[#allocation5 + $0x300] sm:$0xff]
    %v215 = vld [vmem:[#allocation5 + $0x308] sm:$0xff]
    %v216 = vld [vmem:[#allocation5 + $0x310] sm:$0xff]
    %v217 = vld [vmem:[#allocation5 + $0x318] sm:$0xff]
    %v218 = vld [vmem:[#allocation5 + $0x320] sm:$0xff]
    %v219 = vld [vmem:[#allocation5 + $0x328] sm:$0xff]
    %v220 = vld [vmem:[#allocation5 + $0x330] sm:$0xff]
    %v221 = vld [vmem:[#allocation5 + $0x338] sm:$0xff]
    %v222 = vld [vmem:[#allocation5 + $0x340] sm:$0xff]
    %v223 = vld [vmem:[#allocation5 + $0x348] sm:$0xff]
    %v224 = vld [vmem:[#allocation5 + $0x350] sm:$0xff]
    %v225 = vld [vmem:[#allocation5 + $0x358] sm:$0xff]
    %v226 = vld [vmem:[#allocation5 + $0x360] sm:$0xff]
    %v227 = vld [vmem:[#allocation5 + $0x368] sm:$0xff]
    %v228 = vld [vmem:[#allocation5 + $0x370] sm:$0xff]
    %v229 = vld [vmem:[#allocation5 + $0x378] sm:$0xff]
    %v230 = vld [vmem:[#allocation5 + $0x380] sm:$0xff]
    %v231 = vld [vmem:[#allocation5 + $0x388] sm:$0xff]
    %v232 = vld [vmem:[#allocation5 + $0x390] sm:$0xff]
    %v233 = vld [vmem:[#allocation5 + $0x398] sm:$0xff]
    %v234 = vld [vmem:[#allocation5 + $0x3a0] sm:$0xff]
    %v235 = vld [vmem:[#allocation5 + $0x3a8] sm:$0xff]
    %v236 = vld [vmem:[#allocation5 + $0x3b0] sm:$0xff]
    %v237 = vld [vmem:[#allocation5 + $0x3b8] sm:$0xff]
    %v238 = vld [vmem:[#allocation5 + $0x3c0] sm:$0xff]
    %v239 = vld [vmem:[#allocation5 + $0x3c8] sm:$0xff]
    %v240 = vld [vmem:[#allocation5 + $0x3d0] sm:$0xff]
    %v241 = vld [vmem:[#allocation5 + $0x3d8] sm:$0xff]
    %v242 = vld [vmem:[#allocation5 + $0x3e0] sm:$0xff]
    %v243 = vld [vmem:[#allocation5 + $0x3e8] sm:$0xff]
    %v244 = vld [vmem:[#allocation5 + $0x3f0] sm:$0xff]
    %v245 = vld [vmem:[#allocation5 + $0x3f8] sm:$0xff]
    %v246 = vld [vmem:[#allocation5 + $0x400] sm:$0xff]
    %v247 = vld [vmem:[#allocation5 + $0x408] sm:$0xff]
    %v248 = vld [vmem:[#allocation5 + $0x410] sm:$0xff]
    %v249 = vld [vmem:[#allocation5 + $0x418] sm:$0xff]
    %v250 = vld [vmem:[#allocation5 + $0x420] sm:$0xff]
    %v251 = vld [vmem:[#allocation5 + $0x428] sm:$0xff]
    %v252 = vld [vmem:[#allocation5 + $0x430] sm:$0xff]
    %v253 = vld [vmem:[#allocation5 + $0x438] sm:$0xff]
    %v254 = vld [vmem:[#allocation5 + $0x440] sm:$0xff]
    %v255 = vld [vmem:[#allocation5 + $0x448] sm:$0xff]
    %v256 = vld [vmem:[#allocation5 + $0x450] sm:$0xff]
    %v257 = vld [vmem:[#allocation5 + $0x458] sm:$0xff]
    %v258 = vld [vmem:[#allocation5 + $0x460] sm:$0xff]
    %v259 = vld [vmem:[#allocation5 + $0x468] sm:$0xff]
    %v260 = vld [vmem:[#allocation5 + $0x470] sm:$0xff]
    %v261 = vld [vmem:[#allocation5 + $0x478] sm:$0xff]
    %v262 = vld [vmem:[#allocation5 + $0x480] sm:$0xff]
    %v263 = vld [vmem:[#allocation5 + $0x488] sm:$0xff]
    %v264 = vld [vmem:[#allocation5 + $0x490] sm:$0xff]
    %v265 = vld [vmem:[#allocation5 + $0x498] sm:$0xff]
    %v266 = vld [vmem:[#allocation5 + $0x4a0] sm:$0xff]
    %v267 = vld [vmem:[#allocation5 + $0x4a8] sm:$0xff]
    %v268 = vld [vmem:[#allocation5 + $0x4b0] sm:$0xff]
    %v269 = vld [vmem:[#allocation5 + $0x4b8] sm:$0xff]
    %v270 = vld [vmem:[#allocation5 + $0x4c0] sm:$0xff]
    %v271 = vld [vmem:[#allocation5 + $0x4c8] sm:$0xff]
    %v272 = vld [vmem:[#allocation5 + $0x4d0] sm:$0xff]
    %v273 = vld [vmem:[#allocation5 + $0x4d8] sm:$0xff]
    %v274 = vld [vmem:[#allocation5 + $0x4e0] sm:$0xff]
    %v275 = vld [vmem:[#allocation5 + $0x4e8] sm:$0xff]
    %v276 = vld [vmem:[#allocation5 + $0x4f0] sm:$0xff]
    %v277 = vld [vmem:[#allocation5 + $0x4f8] sm:$0xff]
    %v278 = vld [vmem:[#allocation5 + $0x500] sm:$0xff]
    %v279 = vld [vmem:[#allocation5 + $0x508] sm:$0xff]
    %v280 = vld [vmem:[#allocation5 + $0x510] sm:$0xff]
    %v281 = vld [vmem:[#allocation5 + $0x518] sm:$0xff]
    %v282 = vld [vmem:[#allocation5 + $0x520] sm:$0xff]
    %v283 = vld [vmem:[#allocation5 + $0x528] sm:$0xff]
    %v284 = vld [vmem:[#allocation5 + $0x530] sm:$0xff]
    %v285 = vld [vmem:[#allocation5 + $0x538] sm:$0xff]
    %v286 = vld [vmem:[#allocation5 + $0x540] sm:$0xff]
    %v287 = vld [vmem:[#allocation5 + $0x548] sm:$0xff]
    %v288 = vld [vmem:[#allocation5 + $0x550] sm:$0xff]
    %v289 = vld [vmem:[#allocation5 + $0x558] sm:$0xff]
    %v290 = vld [vmem:[#allocation5 + $0x560] sm:$0xff]
    %v291 = vld [vmem:[#allocation5 + $0x568] sm:$0xff]
    %v292 = vld [vmem:[#allocation5 + $0x570] sm:$0xff]
    %v293 = vld [vmem:[#allocation5 + $0x578] sm:$0xff]
    %v294 = vld [vmem:[#allocation5 + $0x580] sm:$0xff]
    %v295 = vld [vmem:[#allocation5 + $0x588] sm:$0xff]
    %v296 = vld [vmem:[#allocation5 + $0x590] sm:$0xff]
    %v297 = vld [vmem:[#allocation5 + $0x598] sm:$0xff]
    %v298 = vld [vmem:[#allocation5 + $0x5a0] sm:$0xff]
    %v299 = vld [vmem:[#allocation5 + $0x5a8] sm:$0xff]
    %v300 = vld [vmem:[#allocation5 + $0x5b0] sm:$0xff]
    %v301 = vld [vmem:[#allocation5 + $0x5b8] sm:$0xff]
    %v302 = vld [vmem:[#allocation5 + $0x5c0] sm:$0xff]
    %v303 = vld [vmem:[#allocation5 + $0x5c8] sm:$0xff]
    %v304 = vld [vmem:[#allocation5 + $0x5d0] sm:$0xff]
    %v305 = vld [vmem:[#allocation5 + $0x5d8] sm:$0xff]
    %v306 = vld [vmem:[#allocation5 + $0x5e0] sm:$0xff]
    %v307 = vld [vmem:[#allocation5 + $0x5e8] sm:$0xff]
    %v308 = vld [vmem:[#allocation5 + $0x5f0] sm:$0xff]
    %v309 = vld [vmem:[#allocation5 + $0x5f8] sm:$0xff]
    %v310 = vld [vmem:[%s4] sm:$0x3f]
    %v312 = vlaneseq
    %v313 = vshrl.u32 %v312, 7
    %v314 = vsub.s32 0, %v313
    %v315 = vrot.slane %v310, %v314
    %v316 = vlaneseq
    %v317 = vshrl.u32 %v316, 7
    %v318 = vsub.s32 1, %v317
    %v319 = vrot.slane %v310, %v318
    %v320 = vlaneseq
    %v321 = vshrl.u32 %v320, 7
    %v322 = vsub.s32 2, %v321
    %v323 = vrot.slane %v310, %v322
    %v324 = vlaneseq
    %v325 = vshrl.u32 %v324, 7
    %v326 = vsub.s32 3, %v325
    %v327 = vrot.slane %v310, %v326
    %v328 = vlaneseq
    %v329 = vshrl.u32 %v328, 7
    %v330 = vsub.s32 4, %v329
    %v331 = vrot.slane %v310, %v330
    %v332 = vlaneseq
    %v333 = vshrl.u32 %v332, 7
    %v334 = vsub.s32 5, %v333
    %v335 = vrot.slane %v310, %v334
    %342 = vmatprep.subr.mxu0 %v119
    %343 = vmatpush1.msra.mxu0 %v118
    %344 = vmatprep.subr.mxu0 %v125
    %345 = vmatpush1.msra.mxu0 %v124
    %346 = vmatprep.subr.mxu0 %v131
    %347 = vmatpush1.msra.mxu0 %v130
    %348 = vmatprep.subr.mxu0 %v137
    %349 = vmatpush1.msra.mxu0 %v136
    %350 = vmatprep.subr.mxu0 %v143
    %351 = vmatpush1.msra.mxu0 %v142
    %352 = vmatprep.subr.mxu0 %v149
    %353 = vmatpush1.msra.mxu0 %v148
    %354 = vmatprep.subr.mxu0 %v155
    %355 = vmatpush1.msra.mxu0 %v154
    %356 = vmatprep.subr.mxu0 %v161
    %357 = vmatpush1.msra.mxu0 %v160
    %358 = vmatprep.subr.mxu0 %v167
    %359 = vmatpush1.msra.mxu0 %v166
    %360 = vmatprep.subr.mxu0 %v173
    %361 = vmatpush1.msra.mxu0 %v172
    %362 = vmatprep.subr.mxu0 %v179
    %363 = vmatpush1.msra.mxu0 %v178
    %364 = vmatprep.subr.mxu0 %v185
    %365 = vmatpush1.msra.mxu0 %v184
    %366 = vmatprep.subr.mxu0 %v191
    %367 = vmatpush1.msra.mxu0 %v190
    %368 = vmatprep.subr.mxu0 %v197
    %369 = vmatpush1.msra.mxu0 %v196
    %370 = vmatprep.subr.mxu0 %v203
    %371 = vmatpush1.msra.mxu0 %v202
    %372 = vmatprep.subr.mxu0 %v209
    %373 = vmatpush1.msra.mxu0 %v208
    %374 = vmatprep.subr.mxu0 %v215
    %375 = vmatpush1.msra.mxu0 %v214
    %376 = vmatprep.subr.mxu0 %v221
    %377 = vmatpush1.msra.mxu0 %v220
    %378 = vmatprep.subr.mxu0 %v227
    %379 = vmatpush1.msra.mxu0 %v226
    %380 = vmatprep.subr.mxu0 %v233
    %381 = vmatpush1.msra.mxu0 %v232
    %382 = vmatprep.subr.mxu0 %v239
    %383 = vmatpush1.msra.mxu0 %v238
    %384 = vmatprep.subr.mxu0 %v245
    %385 = vmatpush1.msra.mxu0 %v244
    %386 = vmatprep.subr.mxu0 %v251
    %387 = vmatpush1.msra.mxu0 %v250
    %388 = vmatprep.subr.mxu0 %v257
    %389 = vmatpush1.msra.mxu0 %v256
    %390 = vmatprep.subr.mxu0 %v263
    %391 = vmatpush1.msra.mxu0 %v262
    %392 = vmatprep.subr.mxu0 %v269
    %393 = vmatpush1.msra.mxu0 %v268
    %394 = vmatprep.subr.mxu0 %v275
    %395 = vmatpush1.msra.mxu0 %v274
    %396 = vmatprep.subr.mxu0 %v281
    %397 = vmatpush1.msra.mxu0 %v280
    %398 = vmatprep.subr.mxu0 %v287
    %399 = vmatpush1.msra.mxu0 %v286
    %400 = vmatprep.subr.mxu0 %v293
    %401 = vmatpush1.msra.mxu0 %v292
    %402 = vmatprep.subr.mxu0 %v299
    %403 = vmatpush1.msra.mxu0 %v298
    %404 = vmatprep.subr.mxu0 %v305
    %405 = vmatpush1.msra.mxu0 %v304
    %406 = vmatprep.mubr.f32.mxu0 %v115
    %407 = vmatmul.mubr.f32.gmra.mrb[0].mxu0 %v114
    %v408 = vpop.f32.mrb[0].mxu0
    %v409 = vadd.f32 %v315, %v408
    %v410 = vpop.f32.mrb[0].mxu0
    %v411 = vadd.f32 %v319, %v410
    %412 = vmatprep.mubr.f32.mxu0 %v117
    %413 = vmatmul.mubr.f32.gmra.mrb[0].mxu0 %v116
    %v414 = vpop.f32.mrb[0].mxu0
    %v415 = vadd.f32 %v315, %v414
    %v416 = vpop.f32.mrb[0].mxu0
    %v417 = vadd.f32 %v319, %v416
    %418 = vdwg.mxu0
    %419 = vmatprep.subr.mxu0 %v121
    %420 = vmatpush1.msra.mxu0 %v120
    %421 = vmatprep.subr.mxu0 %v127
    %422 = vmatpush1.msra.mxu0 %v126
    %423 = vmatprep.subr.mxu0 %v133
    %424 = vmatpush1.msra.mxu0 %v132
    %425 = vmatprep.subr.mxu0 %v139
    %426 = vmatpush1.msra.mxu0 %v138
    %427 = vmatprep.subr.mxu0 %v145
    %428 = vmatpush1.msra.mxu0 %v144
    %429 = vmatprep.subr.mxu0 %v151
    %430 = vmatpush1.msra.mxu0 %v150
    %431 = vmatprep.subr.mxu0 %v157
    %432 = vmatpush1.msra.mxu0 %v156
    %433 = vmatprep.subr.mxu0 %v163
    %434 = vmatpush1.msra.mxu0 %v162
    %435 = vmatprep.subr.mxu0 %v169
    %436 = vmatpush1.msra.mxu0 %v168
    %437 = vmatprep.subr.mxu0 %v175
    %438 = vmatpush1.msra.mxu0 %v174
    %439 = vmatprep.subr.mxu0 %v181
    %440 = vmatpush1.msra.mxu0 %v180
    %441 = vmatprep.subr.mxu0 %v187
    %442 = vmatpush1.msra.mxu0 %v186
    %443 = vmatprep.subr.mxu0 %v193
    %444 = vmatpush1.msra.mxu0 %v192
    %445 = vmatprep.subr.mxu0 %v199
    %446 = vmatpush1.msra.mxu0 %v198
    %447 = vmatprep.subr.mxu0 %v205
    %448 = vmatpush1.msra.mxu0 %v204
    %449 = vmatprep.subr.mxu0 %v211
    %450 = vmatpush1.msra.mxu0 %v210
    %451 = vmatprep.subr.mxu0 %v217
    %452 = vmatpush1.msra.mxu0 %v216
    %453 = vmatprep.subr.mxu0 %v223
    %454 = vmatpush1.msra.mxu0 %v222
    %455 = vmatprep.subr.mxu0 %v229
    %456 = vmatpush1.msra.mxu0 %v228
    %457 = vmatprep.subr.mxu0 %v235
    %458 = vmatpush1.msra.mxu0 %v234
    %459 = vmatprep.subr.mxu0 %v241
    %460 = vmatpush1.msra.mxu0 %v240
    %461 = vmatprep.subr.mxu0 %v247
    %462 = vmatpush1.msra.mxu0 %v246
    %463 = vmatprep.subr.mxu0 %v253
    %464 = vmatpush1.msra.mxu0 %v252
    %465 = vmatprep.subr.mxu0 %v259
    %466 = vmatpush1.msra.mxu0 %v258
    %467 = vmatprep.subr.mxu0 %v265
    %468 = vmatpush1.msra.mxu0 %v264
    %469 = vmatprep.subr.mxu0 %v271
    %470 = vmatpush1.msra.mxu0 %v270
    %471 = vmatprep.subr.mxu0 %v277
    %472 = vmatpush1.msra.mxu0 %v276
    %473 = vmatprep.subr.mxu0 %v283
    %474 = vmatpush1.msra.mxu0 %v282
    %475 = vmatprep.subr.mxu0 %v289
    %476 = vmatpush1.msra.mxu0 %v288
    %477 = vmatprep.subr.mxu0 %v295
    %478 = vmatpush1.msra.mxu0 %v294
    %479 = vmatprep.subr.mxu0 %v301
    %480 = vmatpush1.msra.mxu0 %v300
    %481 = vmatprep.subr.mxu0 %v307
    %482 = vmatpush1.msra.mxu0 %v306
    %483 = vmatprep.mubr.f32.mxu0 %v115
    %484 = vmatmul.mubr.f32.gmra.mrb[0].mxu0 %v114
    %v485 = vpop.f32.mrb[0].mxu0
    %v486 = vadd.f32 %v323, %v485
    %v487 = vpop.f32.mrb[0].mxu0
    %v488 = vadd.f32 %v327, %v487
    %489 = vmatprep.mubr.f32.mxu0 %v117
    %490 = vmatmul.mubr.f32.gmra.mrb[0].mxu0 %v116
    %v491 = vpop.f32.mrb[0].mxu0
    %v492 = vadd.f32 %v323, %v491
    %v493 = vpop.f32.mrb[0].mxu0
    %v494 = vadd.f32 %v327, %v493
    %495 = vdwg.mxu0
    %496 = vmatprep.subr.mxu0 %v123
    %497 = vmatpush1.msra.mxu0 %v122
    %498 = vmatprep.subr.mxu0 %v129
    %499 = vmatpush1.msra.mxu0 %v128
    %500 = vmatprep.subr.mxu0 %v135
    %501 = vmatpush1.msra.mxu0 %v134
    %502 = vmatprep.subr.mxu0 %v141
    %503 = vmatpush1.msra.mxu0 %v140
    %504 = vmatprep.subr.mxu0 %v147
    %505 = vmatpush1.msra.mxu0 %v146
    %506 = vmatprep.subr.mxu0 %v153
    %507 = vmatpush1.msra.mxu0 %v152
    %508 = vmatprep.subr.mxu0 %v159
    %509 = vmatpush1.msra.mxu0 %v158
    %510 = vmatprep.subr.mxu0 %v165
    %511 = vmatpush1.msra.mxu0 %v164
    %512 = vmatprep.subr.mxu0 %v171
    %513 = vmatpush1.msra.mxu0 %v170
    %514 = vmatprep.subr.mxu0 %v177
    %515 = vmatpush1.msra.mxu0 %v176
    %516 = vmatprep.subr.mxu0 %v183
    %517 = vmatpush1.msra.mxu0 %v182
    %518 = vmatprep.subr.mxu0 %v189
    %519 = vmatpush1.msra.mxu0 %v188
    %520 = vmatprep.subr.mxu0 %v195
    %521 = vmatpush1.msra.mxu0 %v194
    %522 = vmatprep.subr.mxu0 %v201
    %523 = vmatpush1.msra.mxu0 %v200
    %524 = vmatprep.subr.mxu0 %v207
    %525 = vmatpush1.msra.mxu0 %v206
    %526 = vmatprep.subr.mxu0 %v213
    %527 = vmatpush1.msra.mxu0 %v212
    %528 = vmatprep.subr.mxu0 %v219
    %529 = vmatpush1.msra.mxu0 %v218
    %530 = vmatprep.subr.mxu0 %v225
    %531 = vmatpush1.msra.mxu0 %v224
    %532 = vmatprep.subr.mxu0 %v231
    %533 = vmatpush1.msra.mxu0 %v230
    %534 = vmatprep.subr.mxu0 %v237
    %535 = vmatpush1.msra.mxu0 %v236
    %536 = vmatprep.subr.mxu0 %v243
    %537 = vmatpush1.msra.mxu0 %v242
    %538 = vmatprep.subr.mxu0 %v249
    %539 = vmatpush1.msra.mxu0 %v248
    %540 = vmatprep.subr.mxu0 %v255
    %541 = vmatpush1.msra.mxu0 %v254
    %542 = vmatprep.subr.mxu0 %v261
    %543 = vmatpush1.msra.mxu0 %v260
    %544 = vmatprep.subr.mxu0 %v267
    %545 = vmatpush1.msra.mxu0 %v266
    %546 = vmatprep.subr.mxu0 %v273
    %547 = vmatpush1.msra.mxu0 %v272
    %548 = vmatprep.subr.mxu0 %v279
    %549 = vmatpush1.msra.mxu0 %v278
    %550 = vmatprep.subr.mxu0 %v285
    %551 = vmatpush1.msra.mxu0 %v284
    %552 = vmatprep.subr.mxu0 %v291
    %553 = vmatpush1.msra.mxu0 %v290
    %554 = vmatprep.subr.mxu0 %v297
    %555 = vmatpush1.msra.mxu0 %v296
    %556 = vmatprep.subr.mxu0 %v303
    %557 = vmatpush1.msra.mxu0 %v302
    %558 = vmatprep.subr.mxu0 %v309
    %559 = vmatpush1.msra.mxu0 %v308
    %560 = vmatprep.mubr.f32.mxu0 %v115
    %561 = vmatmul.mubr.f32.gmra.mrb[0].mxu0 %v114
    %v562 = vpop.f32.mrb[0].mxu0
    %v563 = vadd.f32 %v331, %v562
    %v564 = vpop.f32.mrb[0].mxu0
    %v565 = vadd.f32 %v335, %v564
    %566 = vmatprep.mubr.f32.mxu0 %v117
    %567 = vmatmul.mubr.f32.gmra.mrb[0].mxu0 %v116
    %v568 = vpop.f32.mrb[0].mxu0
    %v569 = vadd.f32 %v331, %v568
    %v570 = vpop.f32.mrb[0].mxu0
    %v571 = vadd.f32 %v335, %v570
    %572 = vdwg.mxu0
    %573 = vst [vmem:[#allocation7] sm:$0xff] %v409
    %574 = vst [vmem:[#allocation7 + $0x8] sm:$0xff] %v411
    %575 = vst [vmem:[#allocation7 + $0x10] sm:$0xff] %v486
    %576 = vst [vmem:[#allocation7 + $0x18] sm:$0xff] %v488
    %577 = vst [vmem:[#allocation7 + $0x20] sm:$0xff] %v563
    %578 = vst [vmem:[#allocation7 + $0x28] sm:$0xff] %v565
    %579 = vst [vmem:[#allocation7 + $0x30] sm:$0xff] %v415
    %580 = vst [vmem:[#allocation7 + $0x38] sm:$0xff] %v417
    %581 = vst [vmem:[#allocation7 + $0x40] sm:$0xff] %v492
    %582 = vst [vmem:[#allocation7 + $0x48] sm:$0xff] %v494
    %583 = vst [vmem:[#allocation7 + $0x50] sm:$0xff] %v569
    %584 = vst [vmem:[#allocation7 + $0x58] sm:$0xff] %v571
    // Predicated region
    $region30: #{tpu_custom_call.1} parent=1 // pred_check
      _
    $region31: #{tpu_custom_call.1} parent=1 // pred_check_branch
      %586 = sbr.rel (0) target = $region33
    $region32: #{tpu_custom_call.1} parent=1 // pred_region
      %s588 = ssub.s32 1536, 1536
      %589 = vsyncadd [#allocation4], %s588
      %s590 = sshll.u32 [#allocation7], 4
      %s591 = int_to_ptr.vmem [resolvable:$true] %s590
      %596 = dma.vmem_to_hbm [thread:$0]  %s591, 1536, %s5, [#allocation4], 768, 768, 48
    $region33: #{tpu_custom_call.1} parent=1 // pred_fallthru
      _
    // Predicated region
    $region34: #{tpu_custom_call.1} parent=1 // pred_check
      _
    $region35: #{tpu_custom_call.1} parent=1 // pred_check_branch
      %598 = sbr.rel (0) target = $region37
    $region36: #{tpu_custom_call.1} parent=1 // pred_region
      %599 = dma.done [#allocation4], 1536
    $region37: #{tpu_custom_call.1} parent=1 // pred_fallthru
      _
    %600 = vsyncpa [#allocation3], 1
    %601 = vsyncpa [#allocation6], 1
    %602 = vsyncpa [#allocation4], 1

</llo_original>
